<compile_context>
chip_gen: v6e
topology: v6e:2x2x1
jax: 0.10.0
libtpu: 0.0.40
codegen_flags: <defaults>
</compile_context>

<pallas_src>
import jax
import jax.numpy as jnp
from jax.experimental import pallas as pl
from jax.experimental.pallas import tpu as pltpu

IN_DIM = 784 + 10          # 794 concatenated features
HID = 200                  # hidden width
K_PAD = 896                # 794 -> 7 * 128 (lane-aligned contraction dim)
H_PAD = 256                # 200 -> 2 * 128 (lane-aligned hidden dim)
EPS = 1e-5                 # nn.LayerNorm default
SLOPE = 0.02               # LeakyReLU negative slope
MAX_BM = 512               # largest batch tile fed to the MXU per grid step


def disc_kernel(x_ref, w1_ref, p_ref, o_ref):
    """One batch tile: (bm, K_PAD) bf16 rows -> (1, bm) sigmoid scores.

    p_ref packs the small parameters as rows of an (8, H_PAD) f32 block:
      row 0: b1     (lanes >= HID are 0)
      row 1: gamma  (lanes >= HID are 0)
      row 2: beta   (lane HID == 1.0, other padded lanes 0)
      row 3: w2     (lane HID == b2,  other padded lanes 0)
    Padded hidden lanes of h are exactly 0 before LayerNorm; after the affine,
    lane HID is exactly 1.0 (gamma kills the normalized value, beta adds 1),
    so the final lane reduction against row 3 contributes 1.0 * b2 exactly.
    """
    # ----- Linear(794 -> 200) on the MXU: bf16 operands, f32 accumulation ----
    h = jnp.dot(x_ref[...], w1_ref[...],
                preferred_element_type=jnp.float32)           # (bm, H_PAD) f32
    h = h + p_ref[0:1, :]                                     # + b1

    # ----- LeakyReLU(0.02) (padded lanes remain exactly zero) -----
    h = jnp.where(h > 0, h, SLOPE * h)

    # ----- LayerNorm(200): one sweep; padded lanes are zero, so dividing by
    #       the true feature count gives exact biased mean / variance -----
    inv_n = 1.0 / HID
    s1 = jnp.sum(h, axis=-1, keepdims=True)                   # (bm, 1)
    s2 = jnp.sum(h * h, axis=-1, keepdims=True)               # (bm, 1)
    mean = s1 * inv_n
    var = jnp.maximum(s2 * inv_n - mean * mean, 0.0)
    h = (h - mean) * jax.lax.rsqrt(var + EPS)
    h = h * p_ref[1:2, :] + p_ref[2:3, :]                     # gamma, beta

    # ----- Linear(200 -> 1) as VPU multiply + lane reduction (f32 exact);
    #       b2 rides along on lane HID.  Stored lane-dense as a (1, bm) row. --
    z = jnp.sum(h * p_ref[3:4, :], axis=-1)                   # (bm,)
    o_ref[0, :] = 1.0 / (1.0 + jnp.exp(-z))


def _round_up(n, m):
    return (n + m - 1) // m * m


def _pick_tile(batch):
    """Batch tile: single step for small B; else >=2 lane-aligned steps so the
    'parallel' batch axis can shard across v7x's two TensorCores."""
    if batch <= 128:
        return _round_up(batch, 16)                 # bf16 sublane packing
    return min(MAX_BM, max(128, _round_up(pl.cdiv(batch, 2), 128)))


def _pack_params(params):
    """Zero-pad / pack parameters: W1 -> bf16 (K_PAD, H_PAD); the small params
    (b1, gamma, beta, w2, b2) -> one (8, H_PAD) f32 block (see disc_kernel)."""
    w1, b1, g, beta, w2, b2 = params
    w1p = jnp.zeros((K_PAD, H_PAD), jnp.bfloat16).at[:IN_DIM, :HID].set(
        w1.astype(jnp.bfloat16))
    b2_scalar = jnp.asarray(b2, jnp.float32).reshape(())
    p = jnp.zeros((8, H_PAD), jnp.float32)
    p = p.at[0, :HID].set(b1.reshape(HID))
    p = p.at[1, :HID].set(g.reshape(HID))
    p = p.at[2, :HID].set(beta.reshape(HID))
    p = p.at[2, HID].set(1.0)                       # bias-fold helper lane
    p = p.at[3, :HID].set(w2.reshape(HID))
    p = p.at[3, HID].set(b2_scalar)                 # b2 folded into lane HID
    return w1p, p


def discriminator_forward_batched(images, labels, params):
    """images: (B, 784), labels: (B, 10) -> (B, 1) sigmoid scores."""
    B = images.shape[0]
    bm = _pick_tile(B)
    b_pad = _round_up(B, bm)
    n_steps = b_pad // bm

    # torch.cat equivalent, produced directly as a zero-padded bf16 buffer
    # (cast before concat/pad so no f32 padded intermediate hits HBM; this
    # also halves the bytes the kernel streams for its dominant operand).
    x = jnp.concatenate([images.astype(jnp.bfloat16),
                         labels.astype(jnp.bfloat16)], axis=-1)   # (B, 794)
    x = jnp.pad(x, ((0, b_pad - B), (0, K_PAD - IN_DIM)))         # (b_pad, 896)

    w1p, pp = _pack_params(params)

    cost = pl.CostEstimate(
        flops=2 * b_pad * K_PAD * H_PAD + 10 * b_pad * H_PAD,
        transcendentals=2 * b_pad,
        bytes_accessed=(b_pad * K_PAD * 2 + K_PAD * H_PAD * 2
                        + 8 * H_PAD * 4 + b_pad * 4),
    )

    out = pl.pallas_call(
        disc_kernel,
        out_shape=jax.ShapeDtypeStruct((1, b_pad), jnp.float32),
        grid=(n_steps,),
        in_specs=[
            pl.BlockSpec((bm, K_PAD), lambda i: (i, 0)),     # x batch tile (bf16)
            pl.BlockSpec((K_PAD, H_PAD), lambda i: (0, 0)),  # W1 (bf16, VMEM-resident)
            pl.BlockSpec((8, H_PAD), lambda i: (0, 0)),      # packed small params
        ],
        out_specs=pl.BlockSpec((1, bm), lambda i: (0, i)),   # lane-dense scores
        compiler_params=pltpu.CompilerParams(
            dimension_semantics=("parallel",)),
        cost_estimate=cost,
    )(x, w1p, pp)

    return out[0, :B].reshape(B, 1)


def discriminator_forward(image, label, params):
    """Matches the PyTorch forward signature: (784,), (10,) -> (1,)."""
    out = discriminator_forward_batched(
        image.reshape(1, 784), label.reshape(1, 10), params)
    return out.reshape(1)


def init_params(key):
    """Deterministic init mirroring nn.Linear / nn.LayerNorm defaults (unpadded)."""
    k1, k2, k3, k4 = jax.random.split(key, 4)
    bound1 = 1.0 / float(IN_DIM) ** 0.5
    w1 = jax.random.uniform(k1, (IN_DIM, HID), jnp.float32, -bound1, bound1)
    b1 = jax.random.uniform(k2, (HID,), jnp.float32, -bound1, bound1)
    gamma = jnp.ones((HID,), jnp.float32)
    beta = jnp.zeros((HID,), jnp.float32)
    bound2 = 1.0 / float(HID) ** 0.5
    w2 = jax.random.uniform(k3, (HID, 1), jnp.float32, -bound2, bound2)
    b2 = jax.random.uniform(k4, (1,), jnp.float32, -bound2, bound2)
    return (w1, b1, gamma, beta, w2, b2)


def reference_forward_f32(images, labels, params):
    """Pure-f32 reference mirroring the PyTorch module exactly."""
    w1, b1, g, beta, w2, b2 = params
    x = jnp.concatenate([images, labels], axis=-1).astype(jnp.float32)
    h = x @ w1 + b1
    h = jnp.where(h > 0, h, SLOPE * h)
    mean = jnp.mean(h, axis=-1, keepdims=True)
    var = jnp.mean((h - mean) ** 2, axis=-1, keepdims=True)
    h = (h - mean) / jnp.sqrt(var + EPS) * g + beta
    z = h @ w2 + b2
    return 1.0 / (1.0 + jnp.exp(-z))


def reference_forward_bf16(images, labels, params):
    """Reference that mirrors the kernel's bf16 first matmul (tight check)."""
    w1, b1, g, beta, w2, b2 = params
    x = jnp.concatenate([images.astype(jnp.bfloat16),
                         labels.astype(jnp.bfloat16)], axis=-1)
    h = jnp.dot(x, w1.astype(jnp.bfloat16),
                preferred_element_type=jnp.float32) + b1
    h = jnp.where(h > 0, h, SLOPE * h)
    s1 = jnp.sum(h, axis=-1, keepdims=True)
    s2 = jnp.sum(h * h, axis=-1, keepdims=True)
    mean = s1 / HID
    var = jnp.maximum(s2 / HID - mean * mean, 0.0)
    h = (h - mean) * jax.lax.rsqrt(var + EPS)
    h = h * g + beta
    z = jnp.sum(h * w2.reshape(1, HID), axis=-1, keepdims=True) + b2
    return 1.0 / (1.0 + jnp.exp(-z))


if __name__ == "__main__":
    key = jax.random.PRNGKey(0)
    k_img, k_lbl, k_param = jax.random.split(key, 3)

    # Deterministic small batch of fake MNIST images and one-hot labels.
    B = 8
    images = jax.random.uniform(k_img, (B, 784), jnp.float32)
    labels = jax.nn.one_hot(
        jax.random.randint(k_lbl, (B,), 0, 10), 10, dtype=jnp.float32)
    params = init_params(k_param)

    # Batched Pallas forward (jit so the concat/pad/bf16-cast fuse into a
    # single XLA op writing one bf16 buffer).
    fwd = jax.jit(discriminator_forward_batched)
    out = jax.block_until_ready(fwd(images, labels, params))
    assert out.shape == (B, 1)

    # Correctness: tight vs. a bf16-mirrored reference, loose vs. pure f32.
    ref_bf16 = reference_forward_bf16(images, labels, params)
    ref_f32 = reference_forward_f32(images, labels, params)
    assert jnp.allclose(out, ref_bf16, atol=1e-4), (out, ref_bf16)
    assert jnp.allclose(out, ref_f32, atol=1.5e-2), (out, ref_f32)

    # Single-sample path matching the PyTorch forward's output shape (1,).
    y1 = jax.block_until_ready(
        discriminator_forward(images[0], labels[0], params))
    assert y1.shape == (1,)
    assert jnp.allclose(y1, ref_f32[0], atol=1.5e-2), (y1, ref_f32[0])

    # TODO(synk): BCELoss / Adam optimiser / train() bookkeeping are training
    # utilities, not part of the forward pass, and are not implemented here.
    print("KERNEL_OK")
</pallas_src>

<mosaic_0001>
module attributes {stable_mosaic.version = 11 : i64} {
  func.func @disc_kernel(%arg0: i32, %arg1: memref<16x896xbf16, #tpu.memory_space<vmem>>, %arg2: memref<896x256xbf16, #tpu.memory_space<vmem>>, %arg3: memref<8x256xf32, #tpu.memory_space<vmem>>, %arg4: memref<1x16xf32, #tpu.memory_space<vmem>>) attributes {dimension_semantics = [#tpu.dimension_semantics<parallel>], iteration_bounds = array<i64: 1>, scalar_prefetch = 0 : i64, scratch_operands = 0 : i64, tpu.core_type = #tpu.core_type<tc>, window_params = [{transform_indices = @transform_0, window_bounds = array<i64: 16, 896>}, {pipeline_mode = #tpu.pipeline_mode<synchronous>, transform_indices = @transform_1, window_bounds = array<i64: 896, 256>}, {pipeline_mode = #tpu.pipeline_mode<synchronous>, transform_indices = @transform_2, window_bounds = array<i64: 8, 256>}, {transform_indices = @transform_3, window_bounds = array<i64: 1, 16>}]} {
    %c0 = arith.constant 0 : index
    %c0_0 = arith.constant 0 : index
    %0 = vector.load %arg1[%c0, %c0_0] : memref<16x896xbf16, #tpu.memory_space<vmem>>, vector<16x896xbf16>
    %c0_1 = arith.constant 0 : index
    %c0_2 = arith.constant 0 : index
    %1 = vector.load %arg2[%c0_1, %c0_2] : memref<896x256xbf16, #tpu.memory_space<vmem>>, vector<896x256xbf16>
    %cst = arith.constant dense<0.000000e+00> : vector<16x256xf32>
    %2 = tpu.matmul %0, %1, %cst {dimension_numbers = #tpu.dot_dimension_numbers<[1], [0], [0], [1], [0, 0, 1, 1], [], []>} : vector<16x896xbf16>, vector<896x256xbf16>, vector<16x256xf32> -> vector<16x256xf32>
    %c0_3 = arith.constant 0 : index
    %c0_4 = arith.constant 0 : index
    %3 = vector.load %arg3[%c0_3, %c0_4] : memref<8x256xf32, #tpu.memory_space<vmem>>, vector<1x256xf32>
    %4 = vector.broadcast %3 : vector<1x256xf32> to vector<16x256xf32>
    %5 = arith.addf %2, %4 : vector<16x256xf32>
    %cst_5 = arith.constant 0.000000e+00 : f32
    %6 = vector.broadcast %cst_5 : f32 to vector<16x256xf32>
    %7 = arith.cmpf ogt, %5, %6 : vector<16x256xf32>
    %cst_6 = arith.constant 2.000000e-02 : f32
    %8 = vector.broadcast %cst_6 : f32 to vector<16x256xf32>
    %9 = arith.mulf %8, %5 : vector<16x256xf32>
    %10 = arith.select %7, %5, %9 : vector<16x256xi1>, vector<16x256xf32>
    %cst_7 = arith.constant dense<0.000000e+00> : vector<16xf32>
    %11 = vector.multi_reduction <add>, %10, %cst_7 [1] : vector<16x256xf32> to vector<16xf32>
    %12 = vector.shape_cast %11 : vector<16xf32> to vector<16x1xf32>
    %13 = arith.mulf %10, %10 : vector<16x256xf32>
    %cst_8 = arith.constant dense<0.000000e+00> : vector<16xf32>
    %14 = vector.multi_reduction <add>, %13, %cst_8 [1] : vector<16x256xf32> to vector<16xf32>
    %15 = vector.shape_cast %14 : vector<16xf32> to vector<16x1xf32>
    %cst_9 = arith.constant 5.000000e-03 : f32
    %16 = vector.broadcast %cst_9 : f32 to vector<16x1xf32>
    %17 = arith.mulf %12, %16 : vector<16x1xf32>
    %cst_10 = arith.constant 5.000000e-03 : f32
    %18 = vector.broadcast %cst_10 : f32 to vector<16x1xf32>
    %19 = arith.mulf %15, %18 : vector<16x1xf32>
    %20 = arith.mulf %17, %17 : vector<16x1xf32>
    %21 = arith.subf %19, %20 : vector<16x1xf32>
    %cst_11 = arith.constant 0.000000e+00 : f32
    %22 = vector.broadcast %cst_11 : f32 to vector<16x1xf32>
    %23 = arith.maximumf %21, %22 : vector<16x1xf32>
    %24 = vector.broadcast %17 : vector<16x1xf32> to vector<16x256xf32>
    %25 = arith.subf %10, %24 : vector<16x256xf32>
    %cst_12 = arith.constant 9.99999974E-6 : f32
    %26 = vector.broadcast %cst_12 : f32 to vector<16x1xf32>
    %27 = arith.addf %23, %26 : vector<16x1xf32>
    %28 = math.rsqrt %27 : vector<16x1xf32>
    %29 = vector.broadcast %28 : vector<16x1xf32> to vector<16x256xf32>
    %30 = arith.mulf %25, %29 : vector<16x256xf32>
    %c1 = arith.constant 1 : index
    %c0_13 = arith.constant 0 : index
    %31 = vector.load %arg3[%c1, %c0_13] : memref<8x256xf32, #tpu.memory_space<vmem>>, vector<1x256xf32>
    %32 = vector.broadcast %31 : vector<1x256xf32> to vector<16x256xf32>
    %33 = arith.mulf %30, %32 : vector<16x256xf32>
    %c2 = arith.constant 2 : index
    %c0_14 = arith.constant 0 : index
    %34 = vector.load %arg3[%c2, %c0_14] : memref<8x256xf32, #tpu.memory_space<vmem>>, vector<1x256xf32>
    %35 = vector.broadcast %34 : vector<1x256xf32> to vector<16x256xf32>
    %36 = arith.addf %33, %35 : vector<16x256xf32>
    %c3 = arith.constant 3 : index
    %c0_15 = arith.constant 0 : index
    %37 = vector.load %arg3[%c3, %c0_15] : memref<8x256xf32, #tpu.memory_space<vmem>>, vector<1x256xf32>
    %38 = vector.broadcast %37 : vector<1x256xf32> to vector<16x256xf32>
    %39 = arith.mulf %36, %38 : vector<16x256xf32>
    %cst_16 = arith.constant dense<0.000000e+00> : vector<16xf32>
    %40 = vector.multi_reduction <add>, %39, %cst_16 [1] : vector<16x256xf32> to vector<16xf32>
    %cst_17 = arith.constant 0.000000e+00 : f32
    %41 = vector.broadcast %cst_17 : f32 to vector<16xf32>
    %42 = arith.subf %41, %40 : vector<16xf32>
    %43 = math.exp %42 : vector<16xf32>
    %cst_18 = arith.constant 1.000000e+00 : f32
    %44 = vector.broadcast %cst_18 : f32 to vector<16xf32>
    %45 = arith.addf %44, %43 : vector<16xf32>
    %cst_19 = arith.constant 1.000000e+00 : f32
    %46 = vector.broadcast %cst_19 : f32 to vector<16xf32>
    %47 = arith.divf %46, %45 : vector<16xf32>
    %c0_20 = arith.constant 0 : index
    %c0_21 = arith.constant 0 : index
    %48 = vector.load %arg4[%c0_20, %c0_21] : memref<1x16xf32, #tpu.memory_space<vmem>>, vector<1x16xf32>
    %49 = vector.shape_cast %48 : vector<1x16xf32> to vector<16xf32>
    %50 = vector.shape_cast %47 : vector<16xf32> to vector<1x16xf32>
    tpu.vector_store %arg4[%c0_20, %c0_21], %50 {strides = array<i32>} : memref<1x16xf32, #tpu.memory_space<vmem>>, vector<1x16xf32>,
    return
  }
  func.func @transform_0(%arg0: i32) -> (i32, i32) {
    %c0_i32 = arith.constant 0 : i32
    %c0_i32_0 = arith.constant 0 : i32
    return %arg0, %c0_i32 : i32, i32
  }
  func.func @transform_1(%arg0: i32) -> (i32, i32) {
    %c0_i32 = arith.constant 0 : i32
    %c0_i32_0 = arith.constant 0 : i32
    %c0_i32_1 = arith.constant 0 : i32
    return %c0_i32, %c0_i32_0 : i32, i32
  }
  func.func @transform_2(%arg0: i32) -> (i32, i32) {
    %c0_i32 = arith.constant 0 : i32
    %c0_i32_0 = arith.constant 0 : i32
    %c0_i32_1 = arith.constant 0 : i32
    return %c0_i32, %c0_i32_0 : i32, i32
  }
  func.func @transform_3(%arg0: i32) -> (i32, i32) {
    %c0_i32 = arith.constant 0 : i32
    %c0_i32_0 = arith.constant 0 : i32
    return %c0_i32, %arg0 : i32, i32
  }
}

</mosaic_0001>

<llo_original>
// kernel: discriminator_forward_batched.1
$region0: #{discriminator_forward_batched.1}
  #allocation0 [shape = 'u32[]', space=smem, size = 0x4, offset = 0x4, fixed_abs, tag = 'smem constant byte address 0x4 - core index']
  #allocation1 [shape = 'u32[144,128]{1,0:T(1,128)}', space=vmem, size = 0x12000, scoped, tag = 'internal scratch']
  %s0 = inlined_call_operand.vmem [shape: bf16[16,896], index: 0, kind: input, shape index: {}]
  %s1 = inlined_call_operand.vmem [shape: bf16[896,256], index: 1, kind: input, shape index: {}]
  %s2 = inlined_call_operand.vmem [shape: f32[8,256], index: 2, kind: input, shape index: {}]
  %s3 = inlined_call_operand.vmem [shape: f32[1,16], index: 3, kind: output, shape index: {}]
  %s4 = sld [smem:[#allocation0]]
  $region22: #{discriminator_forward_batched.1} parent=0
    _
  %s6 = ssub.s32 1, %s4
  %s7 = scalar_select 0, %s6, %s4
  // Predicated region
  $region2: #{discriminator_forward_batched.1} parent=0 // pred_check
    _
  $region3: #{discriminator_forward_batched.1} parent=0 // pred_check_branch
    %9 = sbr.rel (0) target = $region5
  $region4: #{discriminator_forward_batched.1} parent=0 // pred_region
    _
  $region5: #{discriminator_forward_batched.1} parent=0 // pred_fallthru
    _
  // Predicated region
  $region6: #{discriminator_forward_batched.1} parent=0 // pred_check
    _
  $region7: #{discriminator_forward_batched.1} parent=0 // pred_check_branch
    %11 = sbr.rel (0) target = $region9
  $region8: #{discriminator_forward_batched.1} parent=0 // pred_region
    _
  $region9: #{discriminator_forward_batched.1} parent=0 // pred_fallthru
    _
  // Predicated region
  $region10: #{discriminator_forward_batched.1} parent=0 // pred_check
    _
  $region11: #{discriminator_forward_batched.1} parent=0 // pred_check_branch
    %13 = sbr.rel (0) target = $region13
  $region12: #{discriminator_forward_batched.1} parent=0 // pred_region
    _
  $region13: #{discriminator_forward_batched.1} parent=0 // pred_fallthru
    _
  %v15 = vld [vmem:[%s0] sm:$0xff]
  %v16 = vld [vmem:[%s0 + $0x8] sm:$0xff]
  %v17 = vld [vmem:[%s0 + $0x10] sm:$0xff]
  %v18 = vld [vmem:[%s0 + $0x18] sm:$0xf]
  %v19 = vld [vmem:[%s0 + $0x1c] sm:$0xff]
  %v20 = vld [vmem:[%s0 + $0x24] sm:$0xff]
  %v21 = vld [vmem:[%s0 + $0x2c] sm:$0xff]
  %v22 = vld [vmem:[%s0 + $0x34] sm:$0xf]
  %v23 = vld [vmem:[%s1] sm:$0xff]
  %v24 = vld [vmem:[%s1 + $0x8] sm:$0xff]
  %v25 = vld [vmem:[%s1 + $0x10] sm:$0xff]
  %v26 = vld [vmem:[%s1 + $0x18] sm:$0xff]
  %v27 = vld [vmem:[%s1 + $0x20] sm:$0xff]
  %v28 = vld [vmem:[%s1 + $0x28] sm:$0xff]
  %v29 = vld [vmem:[%s1 + $0x30] sm:$0xff]
  %v30 = vld [vmem:[%s1 + $0x38] sm:$0xff]
  %v31 = vld [vmem:[%s1 + $0x40] sm:$0xff]
  %v32 = vld [vmem:[%s1 + $0x48] sm:$0xff]
  %v33 = vld [vmem:[%s1 + $0x50] sm:$0xff]
  %v34 = vld [vmem:[%s1 + $0x58] sm:$0xff]
  %v35 = vld [vmem:[%s1 + $0x60] sm:$0xff]
  %v36 = vld [vmem:[%s1 + $0x68] sm:$0xff]
  %v37 = vld [vmem:[%s1 + $0x70] sm:$0xff]
  %v38 = vld [vmem:[%s1 + $0x78] sm:$0xff]
  %v39 = vld [vmem:[%s1 + $0x80] sm:$0xff]
  %v40 = vld [vmem:[%s1 + $0x88] sm:$0xff]
  %v41 = vld [vmem:[%s1 + $0x90] sm:$0xff]
  %v42 = vld [vmem:[%s1 + $0x98] sm:$0xff]
  %v43 = vld [vmem:[%s1 + $0xa0] sm:$0xff]
  %v44 = vld [vmem:[%s1 + $0xa8] sm:$0xff]
  %v45 = vld [vmem:[%s1 + $0xb0] sm:$0xff]
  %v46 = vld [vmem:[%s1 + $0xb8] sm:$0xff]
  %v47 = vld [vmem:[%s1 + $0xc0] sm:$0xff]
  %v48 = vld [vmem:[%s1 + $0xc8] sm:$0xff]
  %v49 = vld [vmem:[%s1 + $0xd0] sm:$0xff]
  %v50 = vld [vmem:[%s1 + $0xd8] sm:$0xff]
  %v51 = vld [vmem:[%s1 + $0xe0] sm:$0xff]
  %v52 = vld [vmem:[%s1 + $0xe8] sm:$0xff]
  %v53 = vld [vmem:[%s1 + $0xf0] sm:$0xff]
  %v54 = vld [vmem:[%s1 + $0xf8] sm:$0xff]
  %v55 = vld [vmem:[%s1 + $0x100] sm:$0xff]
  %v56 = vld [vmem:[%s1 + $0x108] sm:$0xff]
  %v57 = vld [vmem:[%s1 + $0x110] sm:$0xff]
  %v58 = vld [vmem:[%s1 + $0x118] sm:$0xff]
  %v59 = vld [vmem:[%s1 + $0x120] sm:$0xff]
  %v60 = vld [vmem:[%s1 + $0x128] sm:$0xff]
  %v61 = vld [vmem:[%s1 + $0x130] sm:$0xff]
  %v62 = vld [vmem:[%s1 + $0x138] sm:$0xff]
  %v63 = vld [vmem:[%s1 + $0x140] sm:$0xff]
  %v64 = vld [vmem:[%s1 + $0x148] sm:$0xff]
  %v65 = vld [vmem:[%s1 + $0x150] sm:$0xff]
  %v66 = vld [vmem:[%s1 + $0x158] sm:$0xff]
  %v67 = vld [vmem:[%s1 + $0x160] sm:$0xff]
  %v68 = vld [vmem:[%s1 + $0x168] sm:$0xff]
  %v69 = vld [vmem:[%s1 + $0x170] sm:$0xff]
  %v70 = vld [vmem:[%s1 + $0x178] sm:$0xff]
  %v71 = vld [vmem:[%s1 + $0x180] sm:$0xff]
  %v72 = vld [vmem:[%s1 + $0x188] sm:$0xff]
  %v73 = vld [vmem:[%s1 + $0x190] sm:$0xff]
  %v74 = vld [vmem:[%s1 + $0x198] sm:$0xff]
  %v75 = vld [vmem:[%s1 + $0x1a0] sm:$0xff]
  %v76 = vld [vmem:[%s1 + $0x1a8] sm:$0xff]
  %v77 = vld [vmem:[%s1 + $0x1b0] sm:$0xff]
  %v78 = vld [vmem:[%s1 + $0x1b8] sm:$0xff]
  %v79 = vld [vmem:[%s1 + $0x1c0] sm:$0xff]
  %v80 = vld [vmem:[%s1 + $0x1c8] sm:$0xff]
  %v81 = vld [vmem:[%s1 + $0x1d0] sm:$0xff]
  %v82 = vld [vmem:[%s1 + $0x1d8] sm:$0xff]
  %v83 = vld [vmem:[%s1 + $0x1e0] sm:$0xff]
  %v84 = vld [vmem:[%s1 + $0x1e8] sm:$0xff]
  %v85 = vld [vmem:[%s1 + $0x1f0] sm:$0xff]
  %v86 = vld [vmem:[%s1 + $0x1f8] sm:$0xff]
  %v87 = vld [vmem:[%s1 + $0x200] sm:$0xff]
  %v88 = vld [vmem:[%s1 + $0x208] sm:$0xff]
  %v89 = vld [vmem:[%s1 + $0x210] sm:$0xff]
  %v90 = vld [vmem:[%s1 + $0x218] sm:$0xff]
  %v91 = vld [vmem:[%s1 + $0x220] sm:$0xff]
  %v92 = vld [vmem:[%s1 + $0x228] sm:$0xff]
  %v93 = vld [vmem:[%s1 + $0x230] sm:$0xff]
  %v94 = vld [vmem:[%s1 + $0x238] sm:$0xff]
  %v95 = vld [vmem:[%s1 + $0x240] sm:$0xff]
  %v96 = vld [vmem:[%s1 + $0x248] sm:$0xff]
  %v97 = vld [vmem:[%s1 + $0x250] sm:$0xff]
  %v98 = vld [vmem:[%s1 + $0x258] sm:$0xff]
  %v99 = vld [vmem:[%s1 + $0x260] sm:$0xff]
  %v100 = vld [vmem:[%s1 + $0x268] sm:$0xff]
  %v101 = vld [vmem:[%s1 + $0x270] sm:$0xff]
  %v102 = vld [vmem:[%s1 + $0x278] sm:$0xff]
  %v103 = vld [vmem:[%s1 + $0x280] sm:$0xff]
  %v104 = vld [vmem:[%s1 + $0x288] sm:$0xff]
  %v105 = vld [vmem:[%s1 + $0x290] sm:$0xff]
  %v106 = vld [vmem:[%s1 + $0x298] sm:$0xff]
  %v107 = vld [vmem:[%s1 + $0x2a0] sm:$0xff]
  %v108 = vld [vmem:[%s1 + $0x2a8] sm:$0xff]
  %v109 = vld [vmem:[%s1 + $0x2b0] sm:$0xff]
  %v110 = vld [vmem:[%s1 + $0x2b8] sm:$0xff]
  %v111 = vld [vmem:[%s1 + $0x2c0] sm:$0xff]
  %v112 = vld [vmem:[%s1 + $0x2c8] sm:$0xff]
  %v113 = vld [vmem:[%s1 + $0x2d0] sm:$0xff]
  %v114 = vld [vmem:[%s1 + $0x2d8] sm:$0xff]
  %v115 = vld [vmem:[%s1 + $0x2e0] sm:$0xff]
  %v116 = vld [vmem:[%s1 + $0x2e8] sm:$0xff]
  %v117 = vld [vmem:[%s1 + $0x2f0] sm:$0xff]
  %v118 = vld [vmem:[%s1 + $0x2f8] sm:$0xff]
  %v119 = vld [vmem:[%s1 + $0x300] sm:$0xff]
  %v120 = vld [vmem:[%s1 + $0x308] sm:$0xff]
  %v121 = vld [vmem:[%s1 + $0x310] sm:$0xff]
  %v122 = vld [vmem:[%s1 + $0x318] sm:$0xff]
  %v123 = vld [vmem:[%s1 + $0x320] sm:$0xff]
  %v124 = vld [vmem:[%s1 + $0x328] sm:$0xff]
  %v125 = vld [vmem:[%s1 + $0x330] sm:$0xff]
  %v126 = vld [vmem:[%s1 + $0x338] sm:$0xff]
  %v127 = vld [vmem:[%s1 + $0x340] sm:$0xff]
  %v128 = vld [vmem:[%s1 + $0x348] sm:$0xff]
  %v129 = vld [vmem:[%s1 + $0x350] sm:$0xff]
  %v130 = vld [vmem:[%s1 + $0x358] sm:$0xff]
  %v131 = vld [vmem:[%s1 + $0x360] sm:$0xff]
  %v132 = vld [vmem:[%s1 + $0x368] sm:$0xff]
  %v133 = vld [vmem:[%s1 + $0x370] sm:$0xff]
  %v134 = vld [vmem:[%s1 + $0x378] sm:$0xff]
  %v135 = vld [vmem:[%s2] ss:$8 sm:$0x3]
  %v137 = vlaneseq
  %v138 = vshrl.u32 %v137, 7
  %v139 = vsub.s32 0, %v138
  %v140 = vrot.slane %v135, %v139
  %v141 = vlaneseq
  %v142 = vshrl.u32 %v141, 7
  %v143 = vsub.s32 1, %v142
  %v144 = vrot.slane %v135, %v143
  %v155 = vunpack.c.l.b16 %v15
  %v156 = vunpack.c.h.b16 %v15
  %v157 = vunpack.c.l.b16 %v16
  %v158 = vunpack.c.h.b16 %v16
  %v159 = vunpack.c.l.b16 %v17
  %v160 = vunpack.c.h.b16 %v17
  %v161 = vunpack.c.l.b16 %v18
  %v162 = vunpack.c.l.b16 %v19
  %v163 = vunpack.c.h.b16 %v19
  %v164 = vunpack.c.l.b16 %v20
  %v165 = vunpack.c.h.b16 %v20
  %v166 = vunpack.c.l.b16 %v21
  %v167 = vunpack.c.h.b16 %v21
  %v168 = vunpack.c.l.b16 %v22
  %v169 = vpack.c.b16 %v162, %v155
  %v170 = vpack.c.b16 %v163, %v156
  %v171 = vpack.c.b16 %v164, %v157
  %v172 = vpack.c.b16 %v165, %v158
  %v173 = vpack.c.b16 %v166, %v159
  %v174 = vpack.c.b16 %v167, %v160
  %v175 = vpack.c.b16 %v168, %v161
  %v295 = vunpack.c.l.b16 %v23
  %v296 = vunpack.c.h.b16 %v23
  %v297 = vunpack.c.l.b16 %v24
  %v298 = vunpack.c.h.b16 %v24
  %v299 = vunpack.c.l.b16 %v25
  %v300 = vunpack.c.h.b16 %v25
  %v301 = vunpack.c.l.b16 %v26
  %v302 = vunpack.c.h.b16 %v26
  %v303 = vunpack.c.l.b16 %v27
  %v304 = vunpack.c.h.b16 %v27
  %v305 = vunpack.c.l.b16 %v28
  %v306 = vunpack.c.h.b16 %v28
  %v307 = vunpack.c.l.b16 %v29
  %v308 = vunpack.c.h.b16 %v29
  %v309 = vunpack.c.l.b16 %v30
  %v310 = vunpack.c.h.b16 %v30
  %v311 = vunpack.c.l.b16 %v31
  %v312 = vunpack.c.h.b16 %v31
  %v313 = vunpack.c.l.b16 %v32
  %v314 = vunpack.c.h.b16 %v32
  %v315 = vunpack.c.l.b16 %v33
  %v316 = vunpack.c.h.b16 %v33
  %v317 = vunpack.c.l.b16 %v34
  %v318 = vunpack.c.h.b16 %v34
  %v319 = vunpack.c.l.b16 %v35
  %v320 = vunpack.c.h.b16 %v35
  %v321 = vunpack.c.l.b16 %v36
  %v322 = vunpack.c.h.b16 %v36
  %v323 = vunpack.c.l.b16 %v37
  %v324 = vunpack.c.h.b16 %v37
  %v325 = vunpack.c.l.b16 %v38
  %v326 = vunpack.c.h.b16 %v38
  %v327 = vunpack.c.l.b16 %v39
  %v328 = vunpack.c.h.b16 %v39
  %v329 = vunpack.c.l.b16 %v40
  %v330 = vunpack.c.h.b16 %v40
  %v331 = vunpack.c.l.b16 %v41
  %v332 = vunpack.c.h.b16 %v41
  %v333 = vunpack.c.l.b16 %v42
  %v334 = vunpack.c.h.b16 %v42
  %v335 = vunpack.c.l.b16 %v43
  %v336 = vunpack.c.h.b16 %v43
  %v337 = vunpack.c.l.b16 %v44
  %v338 = vunpack.c.h.b16 %v44
  %v339 = vunpack.c.l.b16 %v45
  %v340 = vunpack.c.h.b16 %v45
  %v341 = vunpack.c.l.b16 %v46
  %v342 = vunpack.c.h.b16 %v46
  %v343 = vunpack.c.l.b16 %v47
  %v344 = vunpack.c.h.b16 %v47
  %v345 = vunpack.c.l.b16 %v48
  %v346 = vunpack.c.h.b16 %v48
  %v347 = vunpack.c.l.b16 %v49
  %v348 = vunpack.c.h.b16 %v49
  %v349 = vunpack.c.l.b16 %v50
  %v350 = vunpack.c.h.b16 %v50
  %v351 = vunpack.c.l.b16 %v51
  %v352 = vunpack.c.h.b16 %v51
  %v353 = vunpack.c.l.b16 %v52
  %v354 = vunpack.c.h.b16 %v52
  %v355 = vunpack.c.l.b16 %v53
  %v356 = vunpack.c.h.b16 %v53
  %v357 = vunpack.c.l.b16 %v54
  %v358 = vunpack.c.h.b16 %v54
  %v359 = vunpack.c.l.b16 %v55
  %v360 = vunpack.c.h.b16 %v55
  %v361 = vunpack.c.l.b16 %v56
  %v362 = vunpack.c.h.b16 %v56
  %v363 = vunpack.c.l.b16 %v57
  %v364 = vunpack.c.h.b16 %v57
  %v365 = vunpack.c.l.b16 %v58
  %v366 = vunpack.c.h.b16 %v58
  %v367 = vunpack.c.l.b16 %v59
  %v368 = vunpack.c.h.b16 %v59
  %v369 = vunpack.c.l.b16 %v60
  %v370 = vunpack.c.h.b16 %v60
  %v371 = vunpack.c.l.b16 %v61
  %v372 = vunpack.c.h.b16 %v61
  %v373 = vunpack.c.l.b16 %v62
  %v374 = vunpack.c.h.b16 %v62
  %v375 = vunpack.c.l.b16 %v63
  %v376 = vunpack.c.h.b16 %v63
  %v377 = vunpack.c.l.b16 %v64
  %v378 = vunpack.c.h.b16 %v64
  %v379 = vunpack.c.l.b16 %v65
  %v380 = vunpack.c.h.b16 %v65
  %v381 = vunpack.c.l.b16 %v66
  %v382 = vunpack.c.h.b16 %v66
  %v383 = vunpack.c.l.b16 %v67
  %v384 = vunpack.c.h.b16 %v67
  %v385 = vunpack.c.l.b16 %v68
  %v386 = vunpack.c.h.b16 %v68
  %v387 = vunpack.c.l.b16 %v69
  %v388 = vunpack.c.h.b16 %v69
  %v389 = vunpack.c.l.b16 %v70
  %v390 = vunpack.c.h.b16 %v70
  %v391 = vunpack.c.l.b16 %v71
  %v392 = vunpack.c.h.b16 %v71
  %v393 = vunpack.c.l.b16 %v72
  %v394 = vunpack.c.h.b16 %v72
  %v395 = vunpack.c.l.b16 %v73
  %v396 = vunpack.c.h.b16 %v73
  %v397 = vunpack.c.l.b16 %v74
  %v398 = vunpack.c.h.b16 %v74
  %v399 = vunpack.c.l.b16 %v75
  %v400 = vunpack.c.h.b16 %v75
  %v401 = vunpack.c.l.b16 %v76
  %v402 = vunpack.c.h.b16 %v76
  %v403 = vunpack.c.l.b16 %v77
  %v404 = vunpack.c.h.b16 %v77
  %v405 = vunpack.c.l.b16 %v78
  %v406 = vunpack.c.h.b16 %v78
  %v407 = vunpack.c.l.b16 %v79
  %v408 = vunpack.c.h.b16 %v79
  %v409 = vunpack.c.l.b16 %v80
  %v410 = vunpack.c.h.b16 %v80
  %v411 = vunpack.c.l.b16 %v81
  %v412 = vunpack.c.h.b16 %v81
  %v413 = vunpack.c.l.b16 %v82
  %v414 = vunpack.c.h.b16 %v82
  %v415 = vunpack.c.l.b16 %v83
  %v416 = vunpack.c.h.b16 %v83
  %v417 = vunpack.c.l.b16 %v84
  %v418 = vunpack.c.h.b16 %v84
  %v419 = vunpack.c.l.b16 %v85
  %v420 = vunpack.c.h.b16 %v85
  %v421 = vunpack.c.l.b16 %v86
  %v422 = vunpack.c.h.b16 %v86
  %v423 = vunpack.c.l.b16 %v87
  %v424 = vunpack.c.h.b16 %v87
  %v425 = vunpack.c.l.b16 %v88
  %v426 = vunpack.c.h.b16 %v88
  %v427 = vunpack.c.l.b16 %v89
  %v428 = vunpack.c.h.b16 %v89
  %v429 = vunpack.c.l.b16 %v90
  %v430 = vunpack.c.h.b16 %v90
  %v431 = vunpack.c.l.b16 %v91
  %v432 = vunpack.c.h.b16 %v91
  %v433 = vunpack.c.l.b16 %v92
  %v434 = vunpack.c.h.b16 %v92
  %v435 = vunpack.c.l.b16 %v93
  %v436 = vunpack.c.h.b16 %v93
  %v437 = vunpack.c.l.b16 %v94
  %v438 = vunpack.c.h.b16 %v94
  %v439 = vunpack.c.l.b16 %v95
  %v440 = vunpack.c.h.b16 %v95
  %v441 = vunpack.c.l.b16 %v96
  %v442 = vunpack.c.h.b16 %v96
  %v443 = vunpack.c.l.b16 %v97
  %v444 = vunpack.c.h.b16 %v97
  %v445 = vunpack.c.l.b16 %v98
  %v446 = vunpack.c.h.b16 %v98
  %v447 = vunpack.c.l.b16 %v99
  %v448 = vunpack.c.h.b16 %v99
  %v449 = vunpack.c.l.b16 %v100
  %v450 = vunpack.c.h.b16 %v100
  %v451 = vunpack.c.l.b16 %v101
  %v452 = vunpack.c.h.b16 %v101
  %v453 = vunpack.c.l.b16 %v102
  %v454 = vunpack.c.h.b16 %v102
  %v455 = vunpack.c.l.b16 %v103
  %v456 = vunpack.c.h.b16 %v103
  %v457 = vunpack.c.l.b16 %v104
  %v458 = vunpack.c.h.b16 %v104
  %v459 = vunpack.c.l.b16 %v105
  %v460 = vunpack.c.h.b16 %v105
  %v461 = vunpack.c.l.b16 %v106
  %v462 = vunpack.c.h.b16 %v106
  %v463 = vunpack.c.l.b16 %v107
  %v464 = vunpack.c.h.b16 %v107
  %v465 = vunpack.c.l.b16 %v108
  %v466 = vunpack.c.h.b16 %v108
  %v467 = vunpack.c.l.b16 %v109
  %v468 = vunpack.c.h.b16 %v109
  %v469 = vunpack.c.l.b16 %v110
  %v470 = vunpack.c.h.b16 %v110
  %v471 = vunpack.c.l.b16 %v111
  %v472 = vunpack.c.h.b16 %v111
  %v473 = vunpack.c.l.b16 %v112
  %v474 = vunpack.c.h.b16 %v112
  %v475 = vunpack.c.l.b16 %v113
  %v476 = vunpack.c.h.b16 %v113
  %v477 = vunpack.c.l.b16 %v114
  %v478 = vunpack.c.h.b16 %v114
  %v479 = vunpack.c.l.b16 %v115
  %v480 = vunpack.c.h.b16 %v115
  %v481 = vunpack.c.l.b16 %v116
  %v482 = vunpack.c.h.b16 %v116
  %v483 = vunpack.c.l.b16 %v117
  %v484 = vunpack.c.h.b16 %v117
  %v485 = vunpack.c.l.b16 %v118
  %v486 = vunpack.c.h.b16 %v118
  %v487 = vunpack.c.l.b16 %v119
  %v488 = vunpack.c.h.b16 %v119
  %v489 = vunpack.c.l.b16 %v120
  %v490 = vunpack.c.h.b16 %v120
  %v491 = vunpack.c.l.b16 %v121
  %v492 = vunpack.c.h.b16 %v121
  %v493 = vunpack.c.l.b16 %v122
  %v494 = vunpack.c.h.b16 %v122
  %v495 = vunpack.c.l.b16 %v123
  %v496 = vunpack.c.h.b16 %v123
  %v497 = vunpack.c.l.b16 %v124
  %v498 = vunpack.c.h.b16 %v124
  %v499 = vunpack.c.l.b16 %v125
  %v500 = vunpack.c.h.b16 %v125
  %v501 = vunpack.c.l.b16 %v126
  %v502 = vunpack.c.h.b16 %v126
  %v503 = vunpack.c.l.b16 %v127
  %v504 = vunpack.c.h.b16 %v127
  %v505 = vunpack.c.l.b16 %v128
  %v506 = vunpack.c.h.b16 %v128
  %v507 = vunpack.c.l.b16 %v129
  %v508 = vunpack.c.h.b16 %v129
  %v509 = vunpack.c.l.b16 %v130
  %v510 = vunpack.c.h.b16 %v130
  %v511 = vunpack.c.l.b16 %v131
  %v512 = vunpack.c.h.b16 %v131
  %v513 = vunpack.c.l.b16 %v132
  %v514 = vunpack.c.h.b16 %v132
  %v515 = vunpack.c.l.b16 %v133
  %v516 = vunpack.c.h.b16 %v133
  %v517 = vunpack.c.l.b16 %v134
  %v518 = vunpack.c.h.b16 %v134
  %v519 = vpack.c.b16 %v297, %v295
  %v520 = vpack.c.b16 %v298, %v296
  %v521 = vpack.c.b16 %v301, %v299
  %v522 = vpack.c.b16 %v302, %v300
  %v523 = vpack.c.b16 %v305, %v303
  %v524 = vpack.c.b16 %v306, %v304
  %v525 = vpack.c.b16 %v309, %v307
  %v526 = vpack.c.b16 %v310, %v308
  %v527 = vpack.c.b16 %v313, %v311
  %v528 = vpack.c.b16 %v314, %v312
  %v529 = vpack.c.b16 %v317, %v315
  %v530 = vpack.c.b16 %v318, %v316
  %v531 = vpack.c.b16 %v321, %v319
  %v532 = vpack.c.b16 %v322, %v320
  %v533 = vpack.c.b16 %v325, %v323
  %v534 = vpack.c.b16 %v326, %v324
  %v535 = vpack.c.b16 %v329, %v327
  %v536 = vpack.c.b16 %v330, %v328
  %v537 = vpack.c.b16 %v333, %v331
  %v538 = vpack.c.b16 %v334, %v332
  %v539 = vpack.c.b16 %v337, %v335
  %v540 = vpack.c.b16 %v338, %v336
  %v541 = vpack.c.b16 %v341, %v339
  %v542 = vpack.c.b16 %v342, %v340
  %v543 = vpack.c.b16 %v345, %v343
  %v544 = vpack.c.b16 %v346, %v344
  %v545 = vpack.c.b16 %v349, %v347
  %v546 = vpack.c.b16 %v350, %v348
  %v547 = vpack.c.b16 %v353, %v351
  %v548 = vpack.c.b16 %v354, %v352
  %v549 = vpack.c.b16 %v357, %v355
  %v550 = vpack.c.b16 %v358, %v356
  %v551 = vpack.c.b16 %v361, %v359
  %v552 = vpack.c.b16 %v362, %v360
  %v553 = vpack.c.b16 %v365, %v363
  %v554 = vpack.c.b16 %v366, %v364
  %v555 = vpack.c.b16 %v369, %v367
  %v556 = vpack.c.b16 %v370, %v368
  %v557 = vpack.c.b16 %v373, %v371
  %v558 = vpack.c.b16 %v374, %v372
  %v559 = vpack.c.b16 %v377, %v375
  %v560 = vpack.c.b16 %v378, %v376
  %v561 = vpack.c.b16 %v381, %v379
  %v562 = vpack.c.b16 %v382, %v380
  %v563 = vpack.c.b16 %v385, %v383
  %v564 = vpack.c.b16 %v386, %v384
  %v565 = vpack.c.b16 %v389, %v387
  %v566 = vpack.c.b16 %v390, %v388
  %v567 = vpack.c.b16 %v393, %v391
  %v568 = vpack.c.b16 %v394, %v392
  %v569 = vpack.c.b16 %v397, %v395
  %v570 = vpack.c.b16 %v398, %v396
  %v571 = vpack.c.b16 %v401, %v399
  %v572 = vpack.c.b16 %v402, %v400
  %v573 = vpack.c.b16 %v405, %v403
  %v574 = vpack.c.b16 %v406, %v404
  %v575 = vpack.c.b16 %v409, %v407
  %v576 = vpack.c.b16 %v410, %v408
  %v577 = vpack.c.b16 %v413, %v411
  %v578 = vpack.c.b16 %v414, %v412
  %v579 = vpack.c.b16 %v417, %v415
  %v580 = vpack.c.b16 %v418, %v416
  %v581 = vpack.c.b16 %v421, %v419
  %v582 = vpack.c.b16 %v422, %v420
  %v583 = vpack.c.b16 %v425, %v423
  %v584 = vpack.c.b16 %v426, %v424
  %v585 = vpack.c.b16 %v429, %v427
  %v586 = vpack.c.b16 %v430, %v428
  %v587 = vpack.c.b16 %v433, %v431
  %v588 = vpack.c.b16 %v434, %v432
  %v589 = vpack.c.b16 %v437, %v435
  %v590 = vpack.c.b16 %v438, %v436
  %v591 = vpack.c.b16 %v441, %v439
  %v592 = vpack.c.b16 %v442, %v440
  %v593 = vpack.c.b16 %v445, %v443
  %v594 = vpack.c.b16 %v446, %v444
  %v595 = vpack.c.b16 %v449, %v447
  %v596 = vpack.c.b16 %v450, %v448
  %v597 = vpack.c.b16 %v453, %v451
  %v598 = vpack.c.b16 %v454, %v452
  %v599 = vpack.c.b16 %v457, %v455
  %v600 = vpack.c.b16 %v458, %v456
  %v601 = vpack.c.b16 %v461, %v459
  %v602 = vpack.c.b16 %v462, %v460
  %v603 = vpack.c.b16 %v465, %v463
  %v604 = vpack.c.b16 %v466, %v464
  %v605 = vpack.c.b16 %v469, %v467
  %v606 = vpack.c.b16 %v470, %v468
  %v607 = vpack.c.b16 %v473, %v471
  %v608 = vpack.c.b16 %v474, %v472
  %v609 = vpack.c.b16 %v477, %v475
  %v610 = vpack.c.b16 %v478, %v476
  %v611 = vpack.c.b16 %v481, %v479
  %v612 = vpack.c.b16 %v482, %v480
  %v613 = vpack.c.b16 %v485, %v483
  %v614 = vpack.c.b16 %v486, %v484
  %v615 = vpack.c.b16 %v489, %v487
  %v616 = vpack.c.b16 %v490, %v488
  %v617 = vpack.c.b16 %v493, %v491
  %v618 = vpack.c.b16 %v494, %v492
  %v619 = vpack.c.b16 %v497, %v495
  %v620 = vpack.c.b16 %v498, %v496
  %v621 = vpack.c.b16 %v501, %v499
  %v622 = vpack.c.b16 %v502, %v500
  %v623 = vpack.c.b16 %v505, %v503
  %v624 = vpack.c.b16 %v506, %v504
  %v625 = vpack.c.b16 %v509, %v507
  %v626 = vpack.c.b16 %v510, %v508
  %v627 = vpack.c.b16 %v513, %v511
  %v628 = vpack.c.b16 %v514, %v512
  %v629 = vpack.c.b16 %v517, %v515
  %v630 = vpack.c.b16 %v518, %v516
  %743 = vmatprep.subr.bf16.mxu0 %v534
  %744 = vmatpush1.bf16.msra.mxu0 %v533
  %745 = vmatprep.subr.bf16.mxu0 %v532
  %746 = vmatpush1.bf16.msra.mxu0 %v531
  %747 = vmatprep.subr.bf16.mxu0 %v530
  %748 = vmatpush1.bf16.msra.mxu0 %v529
  %749 = vmatprep.subr.bf16.mxu0 %v528
  %750 = vmatpush1.bf16.msra.mxu0 %v527
  %751 = vmatprep.subr.bf16.mxu0 %v526
  %752 = vmatpush1.bf16.msra.mxu0 %v525
  %753 = vmatprep.subr.bf16.mxu0 %v524
  %754 = vmatpush1.bf16.msra.mxu0 %v523
  %755 = vmatprep.subr.bf16.mxu0 %v522
  %756 = vmatpush1.bf16.msra.mxu0 %v521
  %757 = vmatprep.subr.bf16.mxu0 %v520
  %758 = vmatpush1.bf16.msra.mxu0 %v519
  %759 = vmatprep.subr.bf16.mxu0 %v550
  %760 = vmatpush2.bf16.msra.mxu0 %v549
  %761 = vmatprep.subr.bf16.mxu0 %v548
  %762 = vmatpush2.bf16.msra.mxu0 %v547
  %763 = vmatprep.subr.bf16.mxu0 %v546
  %764 = vmatpush2.bf16.msra.mxu0 %v545
  %765 = vmatprep.subr.bf16.mxu0 %v544
  %766 = vmatpush2.bf16.msra.mxu0 %v543
  %767 = vmatprep.subr.bf16.mxu0 %v542
  %768 = vmatpush2.bf16.msra.mxu0 %v541
  %769 = vmatprep.subr.bf16.mxu0 %v540
  %770 = vmatpush2.bf16.msra.mxu0 %v539
  %771 = vmatprep.subr.bf16.mxu0 %v538
  %772 = vmatpush2.bf16.msra.mxu0 %v537
  %773 = vmatprep.subr.bf16.mxu0 %v536
  %774 = vmatpush2.bf16.msra.mxu0 %v535
  %775 = vmatprep.mubr.bf16.mxu0 %v170
  %776 = vmatmul.mubr.bf16.gmra.mxu0 %v169
  %v777 = vpop.f32.mrf.mxu0
  %v778 = vadd.f32 %v140, %v777
  %v779 = vpop.f32.mrf.mxu0
  %v780 = vadd.f32 %v144, %v779
  %v781 = vpop.f32.mrf.mxu0
  %v782 = vadd.f32 %v140, %v781
  %v783 = vpop.f32.mrf.mxu0
  %v784 = vadd.f32 %v144, %v783
  %785 = vdwg.mxu0
  %786 = vmatprep.subr.bf16.mxu0 %v566
  %787 = vmatpush1.bf16.msra.mxu0 %v565
  %788 = vmatprep.subr.bf16.mxu0 %v564
  %789 = vmatpush1.bf16.msra.mxu0 %v563
  %790 = vmatprep.subr.bf16.mxu0 %v562
  %791 = vmatpush1.bf16.msra.mxu0 %v561
  %792 = vmatprep.subr.bf16.mxu0 %v560
  %793 = vmatpush1.bf16.msra.mxu0 %v559
  %794 = vmatprep.subr.bf16.mxu0 %v558
  %795 = vmatpush1.bf16.msra.mxu0 %v557
  %796 = vmatprep.subr.bf16.mxu0 %v556
  %797 = vmatpush1.bf16.msra.mxu0 %v555
  %798 = vmatprep.subr.bf16.mxu0 %v554
  %799 = vmatpush1.bf16.msra.mxu0 %v553
  %800 = vmatprep.subr.bf16.mxu0 %v552
  %801 = vmatpush1.bf16.msra.mxu0 %v551
  %802 = vmatprep.subr.bf16.mxu0 %v582
  %803 = vmatpush2.bf16.msra.mxu0 %v581
  %804 = vmatprep.subr.bf16.mxu0 %v580
  %805 = vmatpush2.bf16.msra.mxu0 %v579
  %806 = vmatprep.subr.bf16.mxu0 %v578
  %807 = vmatpush2.bf16.msra.mxu0 %v577
  %808 = vmatprep.subr.bf16.mxu0 %v576
  %809 = vmatpush2.bf16.msra.mxu0 %v575
  %810 = vmatprep.subr.bf16.mxu0 %v574
  %811 = vmatpush2.bf16.msra.mxu0 %v573
  %812 = vmatprep.subr.bf16.mxu0 %v572
  %813 = vmatpush2.bf16.msra.mxu0 %v571
  %814 = vmatprep.subr.bf16.mxu0 %v570
  %815 = vmatpush2.bf16.msra.mxu0 %v569
  %816 = vmatprep.subr.bf16.mxu0 %v568
  %817 = vmatpush2.bf16.msra.mxu0 %v567
  %818 = vmatprep.mubr.bf16.mxu0 %v172
  %819 = vmatmul.mubr.bf16.gmra.mxu0 %v171
  %v820 = vpop.f32.mrf.mxu0
  %v821 = vadd.f32 %v778, %v820
  %v822 = vpop.f32.mrf.mxu0
  %v823 = vadd.f32 %v780, %v822
  %v824 = vpop.f32.mrf.mxu0
  %v825 = vadd.f32 %v782, %v824
  %v826 = vpop.f32.mrf.mxu0
  %v827 = vadd.f32 %v784, %v826
  %828 = vdwg.mxu0
  %829 = vmatprep.subr.bf16.mxu0 %v598
  %830 = vmatpush1.bf16.msra.mxu0 %v597
  %831 = vmatprep.subr.bf16.mxu0 %v596
  %832 = vmatpush1.bf16.msra.mxu0 %v595
  %833 = vmatprep.subr.bf16.mxu0 %v594
  %834 = vmatpush1.bf16.msra.mxu0 %v593
  %835 = vmatprep.subr.bf16.mxu0 %v592
  %836 = vmatpush1.bf16.msra.mxu0 %v591
  %837 = vmatprep.subr.bf16.mxu0 %v590
  %838 = vmatpush1.bf16.msra.mxu0 %v589
  %839 = vmatprep.subr.bf16.mxu0 %v588
  %840 = vmatpush1.bf16.msra.mxu0 %v587
  %841 = vmatprep.subr.bf16.mxu0 %v586
  %842 = vmatpush1.bf16.msra.mxu0 %v585
  %843 = vmatprep.subr.bf16.mxu0 %v584
  %844 = vmatpush1.bf16.msra.mxu0 %v583
  %845 = vmatprep.subr.bf16.mxu0 %v614
  %846 = vmatpush2.bf16.msra.mxu0 %v613
  %847 = vmatprep.subr.bf16.mxu0 %v612
  %848 = vmatpush2.bf16.msra.mxu0 %v611
  %849 = vmatprep.subr.bf16.mxu0 %v610
  %850 = vmatpush2.bf16.msra.mxu0 %v609
  %851 = vmatprep.subr.bf16.mxu0 %v608
  %852 = vmatpush2.bf16.msra.mxu0 %v607
  %853 = vmatprep.subr.bf16.mxu0 %v606
  %854 = vmatpush2.bf16.msra.mxu0 %v605
  %855 = vmatprep.subr.bf16.mxu0 %v604
  %856 = vmatpush2.bf16.msra.mxu0 %v603
  %857 = vmatprep.subr.bf16.mxu0 %v602
  %858 = vmatpush2.bf16.msra.mxu0 %v601
  %859 = vmatprep.subr.bf16.mxu0 %v600
  %860 = vmatpush2.bf16.msra.mxu0 %v599
  %861 = vmatprep.mubr.bf16.mxu0 %v174
  %862 = vmatmul.mubr.bf16.gmra.mxu0 %v173
  %v863 = vpop.f32.mrf.mxu0
  %v864 = vadd.f32 %v821, %v863
  %v865 = vpop.f32.mrf.mxu0
  %v866 = vadd.f32 %v823, %v865
  %v867 = vpop.f32.mrf.mxu0
  %v868 = vadd.f32 %v825, %v867
  %v869 = vpop.f32.mrf.mxu0
  %v870 = vadd.f32 %v827, %v869
  %871 = vdwg.mxu0
  %872 = vmatprep.subr.bf16.mxu0 %v630
  %873 = vmatpush1.bf16.msra.mxu0 %v629
  %874 = vmatprep.subr.bf16.mxu0 %v628
  %875 = vmatpush1.bf16.msra.mxu0 %v627
  %876 = vmatprep.subr.bf16.mxu0 %v626
  %877 = vmatpush1.bf16.msra.mxu0 %v625
  %878 = vmatprep.subr.bf16.mxu0 %v624
  %879 = vmatpush1.bf16.msra.mxu0 %v623
  %880 = vmatprep.subr.bf16.mxu0 %v622
  %881 = vmatpush1.bf16.msra.mxu0 %v621
  %882 = vmatprep.subr.bf16.mxu0 %v620
  %883 = vmatpush1.bf16.msra.mxu0 %v619
  %884 = vmatprep.subr.bf16.mxu0 %v618
  %885 = vmatpush1.bf16.msra.mxu0 %v617
  %886 = vmatprep.subr.bf16.mxu0 %v616
  %887 = vmatpush1.bf16.msra.mxu0 %v615
  %888 = vmatprep.subr.bf16.mxu0 0
  %889 = vmatpush2.bf16.msra.mxu0 0
  %890 = vmatprep.subr.bf16.mxu0 0
  %891 = vmatpush2.bf16.msra.mxu0 0
  %892 = vmatprep.subr.bf16.mxu0 0
  %893 = vmatpush2.bf16.msra.mxu0 0
  %894 = vmatprep.subr.bf16.mxu0 0
  %895 = vmatpush2.bf16.msra.mxu0 0
  %896 = vmatprep.subr.bf16.mxu0 0
  %897 = vmatpush2.bf16.msra.mxu0 0
  %898 = vmatprep.subr.bf16.mxu0 0
  %899 = vmatpush2.bf16.msra.mxu0 0
  %900 = vmatprep.subr.bf16.mxu0 0
  %901 = vmatpush2.bf16.msra.mxu0 0
  %902 = vmatprep.subr.bf16.mxu0 0
  %903 = vmatpush2.bf16.msra.mxu0 0
  %904 = vmatprep.mubr.bf16.mxu0 0
  %905 = vmatmul.mubr.bf16.gmra.mxu0 %v175
  %v906 = vpop.f32.mrf.mxu0
  %v907 = vadd.f32 %v864, %v906
  %v908 = vpop.f32.mrf.mxu0
  %v909 = vadd.f32 %v866, %v908
  %v910 = vpop.f32.mrf.mxu0
  %v911 = vadd.f32 %v868, %v910
  %v912 = vpop.f32.mrf.mxu0
  %v913 = vadd.f32 %v870, %v912
  %914 = vdwg.mxu0
  %vm915 = vcmp.gt.f32.partialorder %v907, 0.0
  %vm916 = vcmp.gt.f32.partialorder %v909, 0.0
  %vm917 = vcmp.gt.f32.partialorder %v911, 0.0
  %vm918 = vcmp.gt.f32.partialorder %v913, 0.0
  %v919 = vmul.f32 %v907, 0.02
  %v920 = vmul.f32 %v909, 0.02
  %v921 = vmul.f32 %v911, 0.02
  %v922 = vmul.f32 %v913, 0.02
  %v923 = vsel %vm915, %v907, %v919
  %v924 = vsel %vm916, %v909, %v920
  %v925 = vsel %vm917, %v911, %v921
  %v926 = vsel %vm918, %v913, %v922
  %v927 = vadd.f32 %v923, %v924
  %928 = vadd.xlane.f32.xlu0 %v927
  %v929 = vpop.xlane.xlu0 %928
  %v930 = vadd.f32 %v925, %v926
  %931 = vadd.xlane.f32.xlu0 %v930
  %v932 = vpop.xlane.xlu0 %931
  %v933 = vmul.f32 %v923, %v923
  %v934 = vmul.f32 %v924, %v924
  %v935 = vmul.f32 %v925, %v925
  %v936 = vmul.f32 %v926, %v926
  %v937 = vadd.f32 %v933, %v934
  %938 = vadd.xlane.f32.xlu0 %v937
  %v939 = vpop.xlane.xlu0 %938
  %v940 = vadd.f32 %v935, %v936
  %941 = vadd.xlane.f32.xlu0 %v940
  %v942 = vpop.xlane.xlu0 %941
  %v943 = vmul.f32 %v929, 0.005
  %v944 = vmul.f32 %v932, 0.005
  %v945 = vmul.f32 %v939, 0.005
  %v946 = vmul.f32 %v942, 0.005
  %v947 = vmul.f32 %v943, %v943
  %v948 = vmul.f32 %v944, %v944
  %v949 = vsub.f32 %v945, %v947
  %v950 = vsub.f32 %v946, %v948
  %v951 = vmax.f32 %v949, 0.0
  %v952 = vmax.f32 %v950, 0.0
  %v953 = vsub.f32 %v923, %v943
  %v954 = vsub.f32 %v924, %v943
  %v955 = vsub.f32 %v925, %v944
  %v956 = vsub.f32 %v926, %v944
  %v957 = vadd.f32 %v951, 1e-05
  %v958 = vadd.f32 %v952, 1e-05
  %v959 = vrsqrt.pop %v957
  %v960 = vrsqrt.pop %v958
  %v961 = vmul.f32 %v953, %v959
  %v962 = vmul.f32 %v954, %v959
  %v963 = vmul.f32 %v955, %v960
  %v964 = vmul.f32 %v956, %v960
  %s965 = scalar_lea.vmem %s2, 1
  %v966 = vld [vmem:[%s965] ss:$8 sm:$0x3]
  %v968 = vlaneseq
  %v969 = vshrl.u32 %v968, 7
  %v970 = vsub.s32 0, %v969
  %v971 = vrot.slane %v966, %v970
  %v972 = vlaneseq
  %v973 = vshrl.u32 %v972, 7
  %v974 = vsub.s32 1, %v973
  %v975 = vrot.slane %v966, %v974
  %v978 = vmul.f32 %v961, %v971
  %v979 = vmul.f32 %v962, %v975
  %v980 = vmul.f32 %v963, %v971
  %v981 = vmul.f32 %v964, %v975
  %s982 = scalar_lea.vmem %s2, 2
  %v983 = vld [vmem:[%s982] ss:$8 sm:$0x3]
  %v985 = vlaneseq
  %v986 = vshrl.u32 %v985, 7
  %v987 = vsub.s32 0, %v986
  %v988 = vrot.slane %v983, %v987
  %v989 = vlaneseq
  %v990 = vshrl.u32 %v989, 7
  %v991 = vsub.s32 1, %v990
  %v992 = vrot.slane %v983, %v991
  %v995 = vadd.f32 %v978, %v988
  %v996 = vadd.f32 %v979, %v992
  %v997 = vadd.f32 %v980, %v988
  %v998 = vadd.f32 %v981, %v992
  %s999 = scalar_lea.vmem %s2, 3
  %v1000 = vld [vmem:[%s999] ss:$8 sm:$0x3]
  %v1002 = vlaneseq
  %v1003 = vshrl.u32 %v1002, 7
  %v1004 = vsub.s32 0, %v1003
  %v1005 = vrot.slane %v1000, %v1004
  %v1006 = vlaneseq
  %v1007 = vshrl.u32 %v1006, 7
  %v1008 = vsub.s32 1, %v1007
  %v1009 = vrot.slane %v1000, %v1008
  %v1012 = vmul.f32 %v995, %v1005
  %v1013 = vmul.f32 %v996, %v1009
  %v1014 = vmul.f32 %v997, %v1005
  %v1015 = vmul.f32 %v998, %v1009
  %v1016 = vadd.f32 %v1012, %v1013
  %1017 = vadd.xlane.f32.xlu0 %v1016
  %v1018 = vpop.xlane.xlu0 %1017
  %v1019 = vadd.f32 %v1014, %v1015
  %1020 = vadd.xlane.f32.xlu0 %v1019
  %v1021 = vpop.xlane.xlu0 %1020
  %v1022 = vsub.f32 0.0, %v1018
  %v1023 = vsub.f32 0.0, %v1021
  %v1024 = vmul.f32 %v1022, 1.442695
  %v1025 = vpow.pop %v1024
  %v1026 = vmul.f32 %v1023, 1.442695
  %v1027 = vpow.pop %v1026
  %v1028 = vadd.f32 %v1025, 1.0
  %v1029 = vadd.f32 %v1027, 1.0
  %v1030 = vrcp.pop %v1028
  %v1031 = vmul.f32 1.0, %v1030
  %v1032 = vrcp.pop %v1029
  %v1033 = vmul.f32 1.0, %v1032
  %v1036 = vlaneseq
  %v1037 = vand.u32 %v1036, 127
  %v1038 = vlaneseq
  %v1039 = vshrl.u32 %v1038, 7
  %v1040 = vsub.s32 %v1037, %v1039
  %v1041 = vrot.slane %v1031, %v1040
  %v1042 = vadd.s32 %v1037, 4294967288
  %v1043 = vlaneseq
  %v1044 = vshrl.u32 %v1043, 7
  %v1045 = vsub.s32 %v1042, %v1044
  %v1046 = vrot.slane %v1033, %v1045
  %vm1047 = vcmask 130112
  %v1048 = vsel %vm1047, %v1046, %v1041
  %vm1050 = vcmask 122880
  %1051 = vst.msk [vmem:[%s3] sm:$0x1] %vm1050, %v1048
  // Predicated region
  $region14: #{discriminator_forward_batched.1} parent=0 // pred_check
    _
  $region15: #{discriminator_forward_batched.1} parent=0 // pred_check_branch
    %1053 = sbr.rel (0) target = $region17
  $region16: #{discriminator_forward_batched.1} parent=0 // pred_region
    _
  $region17: #{discriminator_forward_batched.1} parent=0 // pred_fallthru
    _
  // Predicated region
  $region18: #{discriminator_forward_batched.1} parent=0 // pred_check
    _
  $region19: #{discriminator_forward_batched.1} parent=0 // pred_check_branch
    %1055 = sbr.rel (0) target = $region21
  $region20: #{discriminator_forward_batched.1} parent=0 // pred_region
    _
  $region21: #{discriminator_forward_batched.1} parent=0 // pred_fallthru
    _

</llo_original>
